<compile_context>
chip_gen: v5e
topology: v5e:2x2
jax: 0.10.0
libtpu: 0.0.40
codegen_flags: <defaults>
</compile_context>

<pallas_src>
import math

import jax
import jax.numpy as jnp
from jax import lax
from jax.experimental import pallas as pl
from jax.experimental.pallas import tpu as pltpu


# Squared-norm floor (== clamping the L2 norm at 1e-12).  The raw torch.div in
# the reference emits NaN/inf only for exactly-zero rows; the guard changes
# behavior only for such rows (and for our zero padding rows, sliced off).
_NORM_EPS_SQ = 1e-24


def _arc_margin_kernel(x_ref, xss_ref, w_ref, o_ref, wss_ref):
    # Grid: (j = out-feature tile [outer, parallel], i = batch tile [inner, arbitrary]).
    # x_ref  : (tb, IN)   features tile, compute dtype (bf16 by default)
    # xss_ref: (tb, 1)    f32 sum(x*x, axis=1), hoisted to the wrapper
    # w_ref  : (tn, IN)   weight tile, compute dtype (VMEM-resident across i)
    # o_ref  : (tb, tn)   cosine tile
    # wss_ref: (1, tn)    f32 scratch: sum(w*w, axis=1) of the resident tile

    # Weight-row sum of squares: computed once per weight tile (i == 0) from
    # the tile already in VMEM -- no extra HBM pass over the weight.  Done as
    # ones @ (w*w).T so the result is produced directly in lane orientation.
    @pl.when(pl.program_id(1) == 0)
    def _():
        wf = w_ref[...].astype(jnp.float32)
        ones = jnp.ones((1, w_ref.shape[1]), jnp.float32)
        wss_ref[...] = lax.dot_general(
            ones, wf * wf,
            dimension_numbers=(((1,), (1,)), ((), ())),
            preferred_element_type=jnp.float32)              # (1, tn) f32

    # Raw matmul on the MXU with f32 accumulation; contraction over the last
    # dim of both operands (== x @ w.T) -- no explicit transpose needed.
    acc = lax.dot_general(
        x_ref[...], w_ref[...],
        dimension_numbers=(((1,), (1,)), ((), ())),
        preferred_element_type=jnp.float32)                  # (tb, tn) f32

    # Normalize the small output tile instead of the big operands (EUP rsqrt).
    inv_x = lax.rsqrt(jnp.maximum(xss_ref[...], _NORM_EPS_SQ))   # (tb, 1)
    inv_w = lax.rsqrt(jnp.maximum(wss_ref[...], _NORM_EPS_SQ))   # (1, tn)
    o_ref[...] = (acc * inv_x * inv_w).astype(o_ref.dtype)


def _round_up(x: int, m: int) -> int:
    return (x + m - 1) // m * m


def arc_margin_product(features, weight, *, compute_dtype=jnp.bfloat16,
                       out_dtype=None):
    """ArcMarginProduct.forward: row-normalized features @ row-normalized weight.T.

    features: (B, in_features), weight: (out_features, in_features).
    Operands are fed to the MXU in `compute_dtype` (bf16 by default); the
    matmul accumulates in f32 and the normalization is applied in f32.
    """
    B, IN = features.shape
    OUT, IN_w = weight.shape
    assert IN == IN_w, (IN, IN_w)
    if out_dtype is None:
        out_dtype = features.dtype
    compute_dtype = jnp.dtype(compute_dtype)
    cbytes = compute_dtype.itemsize
    obytes = jnp.dtype(out_dtype).itemsize

    # ---- Tile selection --------------------------------------------------
    # Batch tile: as large as possible (up to 512) so the weight stream's
    # arithmetic intensity clears the HBM roofline.  Rows aligned to 16 for
    # bf16 sublane packing (8 for 32-bit dtypes).
    row_align = 16 if cbytes < 4 else 8
    if B <= 512:
        tb = _round_up(B, row_align)
        B_pad = tb
    else:
        tb = 512
        B_pad = _round_up(B, tb)

    # Out-feature tile: lane-dense multiple of 128 that divides OUT_pad so the
    # weight only has to be padded to a 128 multiple (avoids a full wrapper
    # HBM copy of the weight for most OUT); prefer 512/256 (full 256-wide MXU
    # on v6e/v7x).
    OUT_pad = _round_up(OUT, 128)
    if OUT_pad <= 1024:
        tn = OUT_pad
    else:
        tn = 128
        for cand in (512, 256, 384):
            if OUT_pad % cand == 0:
                tn = cand
                break

    # ---- VMEM budget (must fit v7x's 64 MiB per-TensorCore VMEM) ----------
    def _tile_bytes(tb_, tn_):
        return (2 * tb_ * IN * cbytes        # features, double-buffered
                + 2 * tn_ * IN * cbytes      # weight, double-buffered
                + 2 * tb_ * tn_ * obytes     # output, double-buffered
                + 2 * tb_ * 128 * 4          # feature sum-of-squares tiles
                + 8 * tn_ * 4                # wss scratch
                + tn_ * IN * 4)              # f32 temp while reducing w*w

    budget = 44 << 20
    while (_tile_bytes(tb, tn) > budget and tb >= 2 * row_align
           and (tb // 2) % 8 == 0 and B_pad % (tb // 2) == 0):
        tb //= 2
    while _tile_bytes(tb, tn) > budget and tn > 128 and tn % 256 == 0:
        tn //= 2
    vmem_limit = int(min(max(_tile_bytes(tb, tn) * 5 // 4, 32 << 20), 60 << 20))

    # ---- Wrapper-side prep -------------------------------------------------
    # Feature row sum-of-squares hoisted out of the kernel (features are tiny
    # next to the weight); computed in f32 from the original input.
    xf32 = features.astype(jnp.float32)
    x_ss = jnp.sum(xf32 * xf32, axis=1, keepdims=True)           # (B, 1) f32

    x = features.astype(compute_dtype)
    w = weight.astype(compute_dtype)
    if B_pad != B:
        x = jnp.pad(x, ((0, B_pad - B), (0, 0)))
        x_ss = jnp.pad(x_ss, ((0, B_pad - B), (0, 0)))
    if OUT_pad != OUT:
        w = jnp.pad(w, ((0, OUT_pad - OUT), (0, 0)))

    n_out_tiles = OUT_pad // tn
    n_batch_tiles = B_pad // tb
    grid = (n_out_tiles, n_batch_tiles)      # weight-resident (outer) ordering

    cost = pl.CostEstimate(
        flops=2 * B_pad * OUT_pad * IN,
        transcendentals=B_pad * n_out_tiles + OUT_pad,
        bytes_accessed=(OUT_pad * IN * cbytes                 # weight read once
                        + n_out_tiles * B_pad * IN * cbytes   # features re-streamed
                        + n_out_tiles * B_pad * 4             # x_ss re-streamed
                        + B_pad * OUT_pad * obytes),          # output written once
    )

    out = pl.pallas_call(
        _arc_margin_kernel,
        out_shape=jax.ShapeDtypeStruct((B_pad, OUT_pad), out_dtype),
        grid=grid,
        in_specs=[
            pl.BlockSpec((tb, IN), lambda j, i: (i, 0)),    # features tile
            pl.BlockSpec((tb, 1), lambda j, i: (i, 0)),     # feature sumsq
            pl.BlockSpec((tn, IN), lambda j, i: (j, 0)),    # weight tile (resident over i)
        ],
        out_specs=pl.BlockSpec((tb, tn), lambda j, i: (i, j)),
        scratch_shapes=[pltpu.VMEM((1, tn), jnp.float32)],
        compiler_params=pltpu.CompilerParams(
            # Inner (batch) axis must be "arbitrary": the wss scratch is
            # initialized at inner index 0, which megacore splitting of a
            # "parallel" axis could otherwise skip on one core.  The outer
            # (out-feature) axis stays "parallel" for the two v7x TensorCores.
            dimension_semantics=("parallel", "arbitrary"),
            vmem_limit_bytes=vmem_limit),
        cost_estimate=cost,
    )(x, x_ss, w)

    return out[:B, :OUT]


def _reference(features, weight):
    f = features.astype(jnp.float32)
    w = weight.astype(jnp.float32)
    fn = f / jnp.linalg.norm(f, axis=1, keepdims=True)
    wn = w / jnp.linalg.norm(w, axis=1, keepdims=True)
    return fn @ wn.T


def _run_case(key, B, IN, OUT, atol):
    k_x, k_w = jax.random.split(key)
    # Deterministic init mirroring ArcMarginProduct.reset_parameters():
    #   stdv = 1/sqrt(in_features); weight ~ U(-stdv, stdv)
    stdv = 1.0 / math.sqrt(IN)
    weight = jax.random.uniform(
        k_w, (OUT, IN), jnp.float32, minval=-stdv, maxval=stdv)
    features = jax.random.normal(k_x, (B, IN), jnp.float32)

    cosine = jax.block_until_ready(arc_margin_product(features, weight))
    ref = _reference(features, weight)
    assert cosine.shape == (B, OUT)
    err = float(jnp.max(jnp.abs(cosine.astype(jnp.float32) - ref)))
    assert err <= atol, (
        f"case (B={B}, IN={IN}, OUT={OUT}): max abs err {err} > {atol}")


if __name__ == "__main__":
    key = jax.random.PRNGKey(0)
    k1, k2 = jax.random.split(key)

    # Small shape consistent with the module (exercises B/OUT padding and the
    # degenerate (1,1) grid).  bf16 operands + f32 accumulation -> loose atol.
    _run_case(k1, B=8, IN=32, OUT=16, atol=2.5e-2)
    # Multi-tile grid (11 out-feature tiles x 2 batch tiles): exercises the
    # weight-resident ordering and the per-weight-tile wss scratch/pl.when path.
    _run_case(k2, B=600, IN=128, OUT=1300, atol=2.5e-2)

    print("KERNEL_OK")
</pallas_src>

<mosaic_0001>
module attributes {stable_mosaic.version = 11 : i64} {
  func.func @_arc_margin_kernel(%arg0: i32, %arg1: i32, %arg2: memref<16x32xbf16, #tpu.memory_space<vmem>>, %arg3: memref<16x1xf32, #tpu.memory_space<vmem>>, %arg4: memref<128x32xbf16, #tpu.memory_space<vmem>>, %arg5: memref<16x128xf32, #tpu.memory_space<vmem>>, %arg6: memref<1x128xf32, #tpu.memory_space<vmem>>) attributes {dimension_semantics = [#tpu.dimension_semantics<parallel>, #tpu.dimension_semantics<arbitrary>], iteration_bounds = array<i64: 1, 1>, scalar_prefetch = 0 : i64, scratch_operands = 1 : i64, tpu.core_type = #tpu.core_type<tc>, window_params = [{transform_indices = @transform_0, window_bounds = array<i64: 16, 32>}, {transform_indices = @transform_1, window_bounds = array<i64: 16, 1>}, {transform_indices = @transform_2, window_bounds = array<i64: 128, 32>}, {transform_indices = @transform_3, window_bounds = array<i64: 16, 128>}]} {
    %c0_i32 = arith.constant 0 : i32
    %0 = arith.cmpi eq, %arg1, %c0_i32 : i32
    %1 = arith.extui %0 : i1 to i32
    %c0_i32_0 = arith.constant 0 : i32
    %2 = arith.cmpi ne, %1, %c0_i32_0 : i32
    scf.if %2 {
      %c0_12 = arith.constant 0 : index
      %c0_13 = arith.constant 0 : index
      %19 = vector.load %arg4[%c0_12, %c0_13] : memref<128x32xbf16, #tpu.memory_space<vmem>>, vector<128x32xbf16>
      %20 = arith.extf %19 : vector<128x32xbf16> to vector<128x32xf32>
      %cst_14 = arith.constant 1.000000e+00 : f32
      %21 = vector.broadcast %cst_14 : f32 to vector<1x32xf32>
      %22 = arith.mulf %20, %20 : vector<128x32xf32>
      %cst_15 = arith.constant dense<0.000000e+00> : vector<1x128xf32>
      %23 = tpu.matmul %21, %22, %cst_15 {dimension_numbers = #tpu.dot_dimension_numbers<[1], [1], [0], [0], [0, 0, 1, 0], [], []>} : vector<1x32xf32>, vector<128x32xf32>, vector<1x128xf32> -> vector<1x128xf32>
      %c0_16 = arith.constant 0 : index
      %c0_17 = arith.constant 0 : index
      %24 = vector.load %arg6[%c0_16, %c0_17] : memref<1x128xf32, #tpu.memory_space<vmem>>, vector<1x128xf32>
      tpu.vector_store %arg6[%c0_16, %c0_17], %23 {strides = array<i32>} : memref<1x128xf32, #tpu.memory_space<vmem>>, vector<1x128xf32>,
    } else {
    }
    %c0 = arith.constant 0 : index
    %c0_1 = arith.constant 0 : index
    %3 = vector.load %arg2[%c0, %c0_1] : memref<16x32xbf16, #tpu.memory_space<vmem>>, vector<16x32xbf16>
    %c0_2 = arith.constant 0 : index
    %c0_3 = arith.constant 0 : index
    %4 = vector.load %arg4[%c0_2, %c0_3] : memref<128x32xbf16, #tpu.memory_space<vmem>>, vector<128x32xbf16>
    %cst = arith.constant dense<0.000000e+00> : vector<16x128xf32>
    %5 = tpu.matmul %3, %4, %cst {dimension_numbers = #tpu.dot_dimension_numbers<[1], [1], [0], [0], [0, 0, 1, 0], [], []>} : vector<16x32xbf16>, vector<128x32xbf16>, vector<16x128xf32> -> vector<16x128xf32>
    %c0_4 = arith.constant 0 : index
    %c0_5 = arith.constant 0 : index
    %6 = vector.load %arg3[%c0_4, %c0_5] : memref<16x1xf32, #tpu.memory_space<vmem>>, vector<16x1xf32>
    %cst_6 = arith.constant 1.000000e-24 : f32
    %7 = vector.broadcast %cst_6 : f32 to vector<16x1xf32>
    %8 = arith.maximumf %6, %7 : vector<16x1xf32>
    %9 = math.rsqrt %8 : vector<16x1xf32>
    %c0_7 = arith.constant 0 : index
    %c0_8 = arith.constant 0 : index
    %10 = vector.load %arg6[%c0_7, %c0_8] : memref<1x128xf32, #tpu.memory_space<vmem>>, vector<1x128xf32>
    %cst_9 = arith.constant 1.000000e-24 : f32
    %11 = vector.broadcast %cst_9 : f32 to vector<1x128xf32>
    %12 = arith.maximumf %10, %11 : vector<1x128xf32>
    %13 = math.rsqrt %12 : vector<1x128xf32>
    %14 = vector.broadcast %9 : vector<16x1xf32> to vector<16x128xf32>
    %15 = arith.mulf %5, %14 : vector<16x128xf32>
    %16 = vector.broadcast %13 : vector<1x128xf32> to vector<16x128xf32>
    %17 = arith.mulf %15, %16 : vector<16x128xf32>
    %c0_10 = arith.constant 0 : index
    %c0_11 = arith.constant 0 : index
    %18 = vector.load %arg5[%c0_10, %c0_11] : memref<16x128xf32, #tpu.memory_space<vmem>>, vector<16x128xf32>
    tpu.vector_store %arg5[%c0_10, %c0_11], %17 {strides = array<i32>} : memref<16x128xf32, #tpu.memory_space<vmem>>, vector<16x128xf32>,
    return
  }
  func.func @transform_0(%arg0: i32, %arg1: i32) -> (i32, i32) {
    %c0_i32 = arith.constant 0 : i32
    %c0_i32_0 = arith.constant 0 : i32
    return %arg1, %c0_i32 : i32, i32
  }
  func.func @transform_1(%arg0: i32, %arg1: i32) -> (i32, i32) {
    %c0_i32 = arith.constant 0 : i32
    %c0_i32_0 = arith.constant 0 : i32
    return %arg1, %c0_i32 : i32, i32
  }
  func.func @transform_2(%arg0: i32, %arg1: i32) -> (i32, i32) {
    %c0_i32 = arith.constant 0 : i32
    %c0_i32_0 = arith.constant 0 : i32
    return %arg0, %c0_i32 : i32, i32
  }
  func.func @transform_3(%arg0: i32, %arg1: i32) -> (i32, i32) {
    %c0_i32 = arith.constant 0 : i32
    return %arg1, %arg0 : i32, i32
  }
}

</mosaic_0001>

<llo_original>
// kernel: tpu_custom_call.1
$region0: #{tpu_custom_call.1}
  #allocation0 [shape = 'u32[]', space=smem, size = 0x4, offset = 0x4, fixed_abs, tag = 'smem constant byte address 0x4 - core index']
  #allocation1 [shape = 'u32[72,128]{1,0:T(1,128)}', space=vmem, size = 0x9000, scoped, tag = 'internal scratch']
  #allocation2 [shape = 'f32[1,128]{1,0:T(1,128)}', space=vmem, size = 0x200, scoped, tag = 'scratch operand']
  %s0 = inlined_call_operand.vmem [shape: bf16[16,32], index: 0, kind: input, shape index: {}]
  %s1 = inlined_call_operand.vmem [shape: f32[16,1], index: 1, kind: input, shape index: {}]
  %s2 = inlined_call_operand.vmem [shape: bf16[128,32], index: 2, kind: input, shape index: {}]
  %s3 = inlined_call_operand.hbm [shape: f32[16,128], index: 3, kind: output, shape index: {}]
  %s4 = sld [smem:[#allocation0]]
  $region26: #{tpu_custom_call.1} parent=0
    _
  %s6 = ssub.s32 1, %s4
  %s7 = scalar_select 0, %s6, %s4
  $region1: #{tpu_custom_call.1} parent=0
    #allocation3 [shape = 'u8[8192]{0}', space=vmem, size = 0x2000, scoped, tag = 'output window, operand 0, single buffered']
    #allocation4 [shape = 's32[1]{0}', space=sflag, size = 0x4, scoped, tag = 'scoped memory for tpu_custom_call.1']
    %8 = vsyncpa [#allocation4], 0
    // Predicated region
    $region2: #{tpu_custom_call.1} parent=1 // pred_check
      _
    $region3: #{tpu_custom_call.1} parent=1 // pred_check_branch
      %10 = sbr.rel (0) target = $region5
    $region4: #{tpu_custom_call.1} parent=1 // pred_region
      _
    $region5: #{tpu_custom_call.1} parent=1 // pred_fallthru
      _
    // Predicated region
    $region6: #{tpu_custom_call.1} parent=1 // pred_check
      _
    $region7: #{tpu_custom_call.1} parent=1 // pred_check_branch
      %12 = sbr.rel (0) target = $region9
    $region8: #{tpu_custom_call.1} parent=1 // pred_region
      _
    $region9: #{tpu_custom_call.1} parent=1 // pred_fallthru
      _
    // Predicated region
    $region10: #{tpu_custom_call.1} parent=1 // pred_check
      _
    $region11: #{tpu_custom_call.1} parent=1 // pred_check_branch
      %14 = sbr.rel (0) target = $region13
    $region12: #{tpu_custom_call.1} parent=1 // pred_region
      _
    $region13: #{tpu_custom_call.1} parent=1 // pred_fallthru
      _
    %p15 = scmp.eq.s32.totalorder 0, 0
    // Predicated region
    $region14: #{tpu_custom_call.1} parent=1 // pred_check
      %p16 = pneg %p15
    $region15: #{tpu_custom_call.1} parent=1 // pred_check_branch
      %18 = sbr.rel (%p16) target = $region17
    $region16: #{tpu_custom_call.1} parent=1 // pred_region
      %v19 = vld [vmem:[%s2] sm:$0xf]
      %v20 = vld [vmem:[%s2 + $0x4] sm:$0xf]
      %v21 = vld [vmem:[%s2 + $0x8] sm:$0xf]
      %v22 = vld [vmem:[%s2 + $0xc] sm:$0xf]
      %v23 = vld [vmem:[%s2 + $0x10] sm:$0xf]
      %v24 = vld [vmem:[%s2 + $0x14] sm:$0xf]
      %v25 = vld [vmem:[%s2 + $0x18] sm:$0xf]
      %v26 = vld [vmem:[%s2 + $0x1c] sm:$0xf]
      %v27 = vld [vmem:[%s2 + $0x20] sm:$0xf]
      %v28 = vld [vmem:[%s2 + $0x24] sm:$0xf]
      %v29 = vld [vmem:[%s2 + $0x28] sm:$0xf]
      %v30 = vld [vmem:[%s2 + $0x2c] sm:$0xf]
      %v31 = vld [vmem:[%s2 + $0x30] sm:$0xf]
      %v32 = vld [vmem:[%s2 + $0x34] sm:$0xf]
      %v33 = vld [vmem:[%s2 + $0x38] sm:$0xf]
      %v34 = vld [vmem:[%s2 + $0x3c] sm:$0xf]
      %v35 = vunpack.c.l.bf16 %v19
      %v36 = vunpack.c.l.bf16 %v20
      %v37 = vunpack.c.l.bf16 %v21
      %v38 = vunpack.c.l.bf16 %v22
      %v39 = vunpack.c.l.bf16 %v23
      %v40 = vunpack.c.l.bf16 %v24
      %v41 = vunpack.c.l.bf16 %v25
      %v42 = vunpack.c.l.bf16 %v26
      %v43 = vunpack.c.l.bf16 %v27
      %v44 = vunpack.c.l.bf16 %v28
      %v45 = vunpack.c.l.bf16 %v29
      %v46 = vunpack.c.l.bf16 %v30
      %v47 = vunpack.c.l.bf16 %v31
      %v48 = vunpack.c.l.bf16 %v32
      %v49 = vunpack.c.l.bf16 %v33
      %v50 = vunpack.c.l.bf16 %v34
      %v51 = vmul.f32 %v35, %v35
      %v52 = vmul.f32 %v36, %v36
      %v53 = vmul.f32 %v37, %v37
      %v54 = vmul.f32 %v38, %v38
      %v55 = vmul.f32 %v39, %v39
      %v56 = vmul.f32 %v40, %v40
      %v57 = vmul.f32 %v41, %v41
      %v58 = vmul.f32 %v42, %v42
      %v59 = vmul.f32 %v43, %v43
      %v60 = vmul.f32 %v44, %v44
      %v61 = vmul.f32 %v45, %v45
      %v62 = vmul.f32 %v46, %v46
      %v63 = vmul.f32 %v47, %v47
      %v64 = vmul.f32 %v48, %v48
      %v65 = vmul.f32 %v49, %v49
      %v66 = vmul.f32 %v50, %v50
      %vm67 = vcmask 261120
      %v69 = vsel %vm67, 1.0, 0
      %v72 = vsel %vm67, %v51, 0
      %v75 = vsel %vm67, %v52, 0
      %v78 = vsel %vm67, %v53, 0
      %v81 = vsel %vm67, %v54, 0
      %v84 = vsel %vm67, %v55, 0
      %v87 = vsel %vm67, %v56, 0
      %v90 = vsel %vm67, %v57, 0
      %v93 = vsel %vm67, %v58, 0
      %v96 = vsel %vm67, %v59, 0
      %v99 = vsel %vm67, %v60, 0
      %v102 = vsel %vm67, %v61, 0
      %v105 = vsel %vm67, %v62, 0
      %v108 = vsel %vm67, %v63, 0
      %v111 = vsel %vm67, %v64, 0
      %v114 = vsel %vm67, %v65, 0
      %v117 = vsel %vm67, %v66, 0
      %119 = vmatpush.xpose.msra.mxu0 %v117
      %120 = vmatpush.xpose.msra.mxu0 %v114
      %121 = vmatpush.xpose.msra.mxu0 %v111
      %122 = vmatpush.xpose.msra.mxu0 %v108
      %123 = vmatpush.xpose.msra.mxu0 %v105
      %124 = vmatpush.xpose.msra.mxu0 %v102
      %125 = vmatpush.xpose.msra.mxu0 %v99
      %126 = vmatpush.xpose.msra.mxu0 %v96
      %127 = vmatpush.xpose.msra.mxu0 %v93
      %128 = vmatpush.xpose.msra.mxu0 %v90
      %129 = vmatpush.xpose.msra.mxu0 %v87
      %130 = vmatpush.xpose.msra.mxu0 %v84
      %131 = vmatpush.xpose.msra.mxu0 %v81
      %132 = vmatpush.xpose.msra.mxu0 %v78
      %133 = vmatpush.xpose.msra.mxu0 %v75
      %134 = vmatpush.xpose.msra.mxu0 %v72
      %135 = vmatmul.f32.gmra.mxu0 %v69
      %v136 = vpop.f32.mrf.mxu0
      %v137 = vadd.f32 0.0, %v136
      %138 = vdwg.mxu0
      %139 = vst [vmem:[#allocation2] sm:$0x1] %v137
    $region17: #{tpu_custom_call.1} parent=1 // pred_fallthru
      _
    %v140 = vld [vmem:[%s0] sm:$0xf]
    %v141 = vld [vmem:[%s0 + $0x4] sm:$0xf]
    %v142 = vld [vmem:[%s2] sm:$0xf]
    %v143 = vld [vmem:[%s2 + $0x4] sm:$0xf]
    %v144 = vld [vmem:[%s2 + $0x8] sm:$0xf]
    %v145 = vld [vmem:[%s2 + $0xc] sm:$0xf]
    %v146 = vld [vmem:[%s2 + $0x10] sm:$0xf]
    %v147 = vld [vmem:[%s2 + $0x14] sm:$0xf]
    %v148 = vld [vmem:[%s2 + $0x18] sm:$0xf]
    %v149 = vld [vmem:[%s2 + $0x1c] sm:$0xf]
    %v150 = vld [vmem:[%s2 + $0x20] sm:$0xf]
    %v151 = vld [vmem:[%s2 + $0x24] sm:$0xf]
    %v152 = vld [vmem:[%s2 + $0x28] sm:$0xf]
    %v153 = vld [vmem:[%s2 + $0x2c] sm:$0xf]
    %v154 = vld [vmem:[%s2 + $0x30] sm:$0xf]
    %v155 = vld [vmem:[%s2 + $0x34] sm:$0xf]
    %v156 = vld [vmem:[%s2 + $0x38] sm:$0xf]
    %v157 = vld [vmem:[%s2 + $0x3c] sm:$0xf]
    %v160 = vunpack.c.l.b16 %v140
    %v161 = vunpack.c.l.b16 %v141
    %v162 = vpack.c.b16 %v161, %v160
    %v179 = vunpack.c.l.b16 %v142
    %v180 = vunpack.c.l.b16 %v143
    %v181 = vunpack.c.l.b16 %v144
    %v182 = vunpack.c.l.b16 %v145
    %v183 = vunpack.c.l.b16 %v146
    %v184 = vunpack.c.l.b16 %v147
    %v185 = vunpack.c.l.b16 %v148
    %v186 = vunpack.c.l.b16 %v149
    %v187 = vunpack.c.l.b16 %v150
    %v188 = vunpack.c.l.b16 %v151
    %v189 = vunpack.c.l.b16 %v152
    %v190 = vunpack.c.l.b16 %v153
    %v191 = vunpack.c.l.b16 %v154
    %v192 = vunpack.c.l.b16 %v155
    %v193 = vunpack.c.l.b16 %v156
    %v194 = vunpack.c.l.b16 %v157
    %v195 = vpack.c.b16 %v180, %v179
    %v196 = vpack.c.b16 %v182, %v181
    %v197 = vpack.c.b16 %v184, %v183
    %v198 = vpack.c.b16 %v186, %v185
    %v199 = vpack.c.b16 %v188, %v187
    %v200 = vpack.c.b16 %v190, %v189
    %v201 = vpack.c.b16 %v192, %v191
    %v202 = vpack.c.b16 %v194, %v193
    %vm203 = vcmask 261120
    %v205 = vsel %vm203, %v162, 0
    %v208 = vsel %vm203, %v195, 0
    %v211 = vsel %vm203, %v196, 0
    %v214 = vsel %vm203, %v197, 0
    %v217 = vsel %vm203, %v198, 0
    %v220 = vsel %vm203, %v199, 0
    %v223 = vsel %vm203, %v200, 0
    %v226 = vsel %vm203, %v201, 0
    %v229 = vsel %vm203, %v202, 0
    %231 = vmatpush.bf16.xpose.msra.mxu0 %v229
    %232 = vmatpush.bf16.xpose.msra.mxu0 %v226
    %233 = vmatpush.bf16.xpose.msra.mxu0 %v223
    %234 = vmatpush.bf16.xpose.msra.mxu0 %v220
    %235 = vmatpush.bf16.xpose.msra.mxu0 %v217
    %236 = vmatpush.bf16.xpose.msra.mxu0 %v214
    %237 = vmatpush.bf16.xpose.msra.mxu0 %v211
    %238 = vmatpush.bf16.xpose.msra.mxu0 %v208
    %239 = vmatmul.bf16.gmra.mxu0 %v205
    %v240 = vpop.f32.mrf.mxu0
    %v241 = vadd.f32 0.0, %v240
    %v242 = vpop.f32.mrf.mxu0
    %v243 = vadd.f32 0.0, %v242
    %244 = vdwg.mxu0
    %v245 = vld [vmem:[%s1] sm:$0xff]
    %v246 = vld [vmem:[%s1 + $0x8] sm:$0xff]
    %v247 = vmax.f32 %v245, 1e-24
    %v248 = vmax.f32 %v246, 1e-24
    %v249 = vrsqrt.pop %v247
    %v250 = vmul.f32 %v249, %v247
    %v251 = vmul.f32 %v250, %v249
    %v252 = vmul.f32 0.5, %v251
    %v253 = vsub.f32 1.5, %v252
    %v254 = vmul.f32 %v249, %v253
    %vm255 = vweird.f32 %v247
    %vm256 = vweird.f32 %v249
    %vm257 = vmor %vm255, %vm256
    %v258 = vsel %vm257, %v249, %v254
    %v259 = vrsqrt.pop %v248
    %v260 = vmul.f32 %v259, %v248
    %v261 = vmul.f32 %v260, %v259
    %v262 = vmul.f32 0.5, %v261
    %v263 = vsub.f32 1.5, %v262
    %v264 = vmul.f32 %v259, %v263
    %vm265 = vweird.f32 %v248
    %vm266 = vweird.f32 %v259
    %vm267 = vmor %vm265, %vm266
    %v268 = vsel %vm267, %v259, %v264
    %v269 = vld [vmem:[#allocation2] sm:$0x1]
    %v270 = vmax.f32 %v269, 1e-24
    %v271 = vrsqrt.pop %v270
    %v272 = vmul.f32 %v271, %v270
    %v273 = vmul.f32 %v272, %v271
    %v274 = vmul.f32 0.5, %v273
    %v275 = vsub.f32 1.5, %v274
    %v276 = vmul.f32 %v271, %v275
    %vm277 = vweird.f32 %v270
    %vm278 = vweird.f32 %v271
    %vm279 = vmor %vm277, %vm278
    %v280 = vsel %vm279, %v271, %v276
    %282 = vset.pattern.permute.xlu0 0
    %283 = vperm.xlu0 %282, %v258
    %v284 = vpop.permute.xlu0 %283
    %287 = vset.pattern.permute.xlu0 0
    %288 = vperm.xlu0 %287, %v268
    %v289 = vpop.permute.xlu0 %288
    %v291 = vmul.f32 %v241, %v284
    %v292 = vmul.f32 %v243, %v289
    %v294 = vperm.slane %v280, 0
    %v296 = vmul.f32 %v291, %v294
    %v297 = vmul.f32 %v292, %v294
    %298 = vst [vmem:[#allocation3] sm:$0xff] %v296
    %299 = vst [vmem:[#allocation3 + $0x8] sm:$0xff] %v297
    // Predicated region
    $region18: #{tpu_custom_call.1} parent=1 // pred_check
      _
    $region19: #{tpu_custom_call.1} parent=1 // pred_check_branch
      %301 = sbr.rel (0) target = $region21
    $region20: #{tpu_custom_call.1} parent=1 // pred_region
      %303 = vsyncadd [#allocation4], 0
      %s304 = sshll.u32 [#allocation3], 4
      %s305 = int_to_ptr.vmem [resolvable:$true] %s304
      %s306 = sshll.u32 %s3, 4
      %s307 = int_to_ptr.hbm [resolvable:$true] %s306
      %312 = dma.vmem_to_hbm [thread:$0]  %s305, 256, %s307, [#allocation4], 128, 128, 8
    $region21: #{tpu_custom_call.1} parent=1 // pred_fallthru
      _
    // Predicated region
    $region22: #{tpu_custom_call.1} parent=1 // pred_check
      _
    $region23: #{tpu_custom_call.1} parent=1 // pred_check_branch
      %314 = sbr.rel (0) target = $region25
    $region24: #{tpu_custom_call.1} parent=1 // pred_region
      %316 = dma.done [#allocation4], 256
    $region25: #{tpu_custom_call.1} parent=1 // pred_fallthru
      _
    %317 = vsyncpa [#allocation4], 1

</llo_original>
